<compile_context>
chip_gen: v7x
topology: tpu7x:2x2x1
jax: 0.10.0
libtpu: 0.0.40
codegen_flags: <defaults>
</compile_context>

<pallas_src>
import jax
import jax.numpy as jnp
from jax import lax
from jax.experimental import pallas as pl
from jax.experimental.pallas import tpu as pltpu


_SMALL_C = 32  # below this, the channel contraction runs on the VPU (unrolled FMAs)


def _make_kernel(C, use_mxu):
    if use_mxu:
        def kernel(x_ref, w_ref, b_ref, o_ref):
            # x_ref: (1, C, TS) VMEM   w_ref: (C, C) VMEM (W + I)   b_ref: (C, 1) VMEM
            x = x_ref[0]                                        # (C, TS)
            # out[co, s] = sum_ci w_eff[ci, co] * x[ci, s]  (contract axis 0 of both)
            y = lax.dot_general(
                w_ref[...], x,
                dimension_numbers=(((0,), (0,)), ((), ())),
                preferred_element_type=jnp.float32)
            y = y + b_ref[...].astype(jnp.float32)              # bias (residual folded in W)
            o_ref[0] = y.astype(o_ref.dtype)
    else:
        def kernel(x_ref, w_ref, b_ref, o_ref):
            # x_ref: (1, C, TS) VMEM   w_ref: (C, C) SMEM (W + I)   b_ref: (1, C) SMEM
            xf = x_ref[0].astype(jnp.float32)                   # (C, TS)
            rows = []
            for co in range(C):
                acc = w_ref[0, co] * xf[0:1, :] + b_ref[0, co]  # first FMA + bias
                for ci in range(1, C):
                    acc = acc + w_ref[ci, co] * xf[ci:ci + 1, :]  # VPU scalar FMA
                rows.append(acc)
            y = jnp.concatenate(rows, axis=0)                   # (C, TS) -> one dense store
            o_ref[0] = y.astype(o_ref.dtype)
    return kernel


def residual_add(x_nchw, w, b, *, ts=2048):
    """out = fn(x) + x where fn is a 1x1 conv (Linear over channels).

    x_nchw: (B, C, H, W);  w: (C_in, C_out) with C_in == C_out == C;  b: (1, C) or (C,).
    """
    B, C, H, W = x_nchw.shape
    HW = H * W
    x3d = x_nchw.reshape(B, C, HW)            # pure reshape -> no extra HBM pass
    b = jnp.asarray(b).reshape(1, C)

    # Fold the residual identity into the weight:  (W + I)^T x = W^T x + x.
    w_eff = jnp.asarray(w, dtype=jnp.float32) + jnp.eye(C, dtype=jnp.float32)

    # Lane tile: full spatial extent if it fits, otherwise a large multiple of 128.
    if HW <= ts:
        ts = HW
    else:
        ts = max((ts // 128) * 128, 128)
    grid = (B, pl.cdiv(HW, ts))               # ragged last tile handled by block padding

    use_mxu = C > _SMALL_C
    kernel = _make_kernel(C, use_mxu)

    x_spec = pl.BlockSpec((1, C, ts), lambda bi, si: (bi, 0, si))
    o_spec = pl.BlockSpec((1, C, ts), lambda bi, si: (bi, 0, si))
    if use_mxu:
        w_in = w_eff.astype(x_nchw.dtype)
        b_in = b.reshape(C, 1)
        w_spec = pl.BlockSpec((C, C), lambda bi, si: (0, 0))   # resident weight in VMEM
        b_spec = pl.BlockSpec((C, 1), lambda bi, si: (0, 0))
    else:
        w_in = w_eff                          # f32 scalars in SMEM
        b_in = b.astype(jnp.float32)
        w_spec = pl.BlockSpec(memory_space=pltpu.MemorySpace.SMEM)
        b_spec = pl.BlockSpec(memory_space=pltpu.MemorySpace.SMEM)

    out3d = pl.pallas_call(
        kernel,
        out_shape=jax.ShapeDtypeStruct((B, C, HW), x_nchw.dtype),
        grid=grid,
        in_specs=[x_spec, w_spec, b_spec],
        out_specs=o_spec,
        compiler_params=pltpu.CompilerParams(
            dimension_semantics=("parallel", "parallel")),
    )(x3d, w_in, b_in)

    return out3d.reshape(B, C, H, W)


def reference(x_nchw, w, b):
    B, C, H, W = x_nchw.shape
    y = jnp.einsum("bchw,cd->bdhw", x_nchw, w)
    return y + jnp.asarray(b).reshape(1, C, 1, 1) + x_nchw


if __name__ == "__main__":
    B, C, H, W = 2, 4, 16, 16
    key = jax.random.PRNGKey(0)
    kx, kw, kb = jax.random.split(key, 3)

    x = jax.random.normal(kx, (B, C, H, W), dtype=jnp.float32)
    # deterministic parameter init for fn (1x1 conv over channels)
    w = jax.random.normal(kw, (C, C), dtype=jnp.float32) * 0.1
    b = jax.random.normal(kb, (1, C), dtype=jnp.float32) * 0.1

    out = jax.block_until_ready(residual_add(x, w, b))
    ref = jax.block_until_ready(reference(x, w, b))

    assert out.shape == x.shape
    assert jnp.allclose(out, ref, atol=1e-5, rtol=1e-5)

    print("KERNEL_OK")
</pallas_src>

<mosaic_0001>
module attributes {stable_mosaic.version = 11 : i64} {
  func.func @kernel(%arg0: i32, %arg1: i32, %arg2: memref<1x4x256xf32, #tpu.memory_space<vmem>>, %arg3: memref<4x4xf32, #tpu.memory_space<smem>>, %arg4: memref<1x4xf32, #tpu.memory_space<smem>>, %arg5: memref<1x4x256xf32, #tpu.memory_space<vmem>>) attributes {dimension_semantics = [#tpu.dimension_semantics<parallel>, #tpu.dimension_semantics<parallel>], iteration_bounds = array<i64: 2, 1>, scalar_prefetch = 0 : i64, scratch_operands = 0 : i64, tpu.core_type = #tpu.core_type<tc>, window_params = [{transform_indices = @transform_0, window_bounds = array<i64: 1, 4, 256>}, {transform_indices = @transform_1, window_bounds = array<i64: 4, 4>}, {transform_indices = @transform_2, window_bounds = array<i64: 1, 4>}, {transform_indices = @transform_3, window_bounds = array<i64: 1, 4, 256>}]} {
    %c0 = arith.constant 0 : index
    %c0_0 = arith.constant 0 : index
    %c0_1 = arith.constant 0 : index
    %0 = vector.load %arg2[%c0, %c0_0, %c0_1] : memref<1x4x256xf32, #tpu.memory_space<vmem>>, vector<1x4x256xf32>
    %1 = vector.shape_cast %0 : vector<1x4x256xf32> to vector<4x256xf32>
    %c0_2 = arith.constant 0 : index
    %c0_3 = arith.constant 0 : index
    %2 = memref.load %arg3[%c0_2, %c0_3] : memref<4x4xf32, #tpu.memory_space<smem>>
    %3 = vector.extract_strided_slice %1 {offsets = [0, 0], sizes = [1, 256], strides = [1, 1]} : vector<4x256xf32> to vector<1x256xf32>
    %4 = vector.broadcast %2 : f32 to vector<1x256xf32>
    %5 = arith.mulf %4, %3 : vector<1x256xf32>
    %c0_4 = arith.constant 0 : index
    %c0_5 = arith.constant 0 : index
    %6 = memref.load %arg4[%c0_4, %c0_5] : memref<1x4xf32, #tpu.memory_space<smem>>
    %7 = vector.broadcast %6 : f32 to vector<1x256xf32>
    %8 = arith.addf %5, %7 : vector<1x256xf32>
    %c1 = arith.constant 1 : index
    %c0_6 = arith.constant 0 : index
    %9 = memref.load %arg3[%c1, %c0_6] : memref<4x4xf32, #tpu.memory_space<smem>>
    %10 = vector.extract_strided_slice %1 {offsets = [1, 0], sizes = [1, 256], strides = [1, 1]} : vector<4x256xf32> to vector<1x256xf32>
    %11 = vector.broadcast %9 : f32 to vector<1x256xf32>
    %12 = arith.mulf %11, %10 : vector<1x256xf32>
    %13 = arith.addf %8, %12 : vector<1x256xf32>
    %c2 = arith.constant 2 : index
    %c0_7 = arith.constant 0 : index
    %14 = memref.load %arg3[%c2, %c0_7] : memref<4x4xf32, #tpu.memory_space<smem>>
    %15 = vector.extract_strided_slice %1 {offsets = [2, 0], sizes = [1, 256], strides = [1, 1]} : vector<4x256xf32> to vector<1x256xf32>
    %16 = vector.broadcast %14 : f32 to vector<1x256xf32>
    %17 = arith.mulf %16, %15 : vector<1x256xf32>
    %18 = arith.addf %13, %17 : vector<1x256xf32>
    %c3 = arith.constant 3 : index
    %c0_8 = arith.constant 0 : index
    %19 = memref.load %arg3[%c3, %c0_8] : memref<4x4xf32, #tpu.memory_space<smem>>
    %20 = vector.extract_strided_slice %1 {offsets = [3, 0], sizes = [1, 256], strides = [1, 1]} : vector<4x256xf32> to vector<1x256xf32>
    %21 = vector.broadcast %19 : f32 to vector<1x256xf32>
    %22 = arith.mulf %21, %20 : vector<1x256xf32>
    %23 = arith.addf %18, %22 : vector<1x256xf32>
    %c0_9 = arith.constant 0 : index
    %c1_10 = arith.constant 1 : index
    %24 = memref.load %arg3[%c0_9, %c1_10] : memref<4x4xf32, #tpu.memory_space<smem>>
    %25 = vector.extract_strided_slice %1 {offsets = [0, 0], sizes = [1, 256], strides = [1, 1]} : vector<4x256xf32> to vector<1x256xf32>
    %26 = vector.broadcast %24 : f32 to vector<1x256xf32>
    %27 = arith.mulf %26, %25 : vector<1x256xf32>
    %c0_11 = arith.constant 0 : index
    %c1_12 = arith.constant 1 : index
    %28 = memref.load %arg4[%c0_11, %c1_12] : memref<1x4xf32, #tpu.memory_space<smem>>
    %29 = vector.broadcast %28 : f32 to vector<1x256xf32>
    %30 = arith.addf %27, %29 : vector<1x256xf32>
    %c1_13 = arith.constant 1 : index
    %c1_14 = arith.constant 1 : index
    %31 = memref.load %arg3[%c1_13, %c1_14] : memref<4x4xf32, #tpu.memory_space<smem>>
    %32 = vector.extract_strided_slice %1 {offsets = [1, 0], sizes = [1, 256], strides = [1, 1]} : vector<4x256xf32> to vector<1x256xf32>
    %33 = vector.broadcast %31 : f32 to vector<1x256xf32>
    %34 = arith.mulf %33, %32 : vector<1x256xf32>
    %35 = arith.addf %30, %34 : vector<1x256xf32>
    %c2_15 = arith.constant 2 : index
    %c1_16 = arith.constant 1 : index
    %36 = memref.load %arg3[%c2_15, %c1_16] : memref<4x4xf32, #tpu.memory_space<smem>>
    %37 = vector.extract_strided_slice %1 {offsets = [2, 0], sizes = [1, 256], strides = [1, 1]} : vector<4x256xf32> to vector<1x256xf32>
    %38 = vector.broadcast %36 : f32 to vector<1x256xf32>
    %39 = arith.mulf %38, %37 : vector<1x256xf32>
    %40 = arith.addf %35, %39 : vector<1x256xf32>
    %c3_17 = arith.constant 3 : index
    %c1_18 = arith.constant 1 : index
    %41 = memref.load %arg3[%c3_17, %c1_18] : memref<4x4xf32, #tpu.memory_space<smem>>
    %42 = vector.extract_strided_slice %1 {offsets = [3, 0], sizes = [1, 256], strides = [1, 1]} : vector<4x256xf32> to vector<1x256xf32>
    %43 = vector.broadcast %41 : f32 to vector<1x256xf32>
    %44 = arith.mulf %43, %42 : vector<1x256xf32>
    %45 = arith.addf %40, %44 : vector<1x256xf32>
    %c0_19 = arith.constant 0 : index
    %c2_20 = arith.constant 2 : index
    %46 = memref.load %arg3[%c0_19, %c2_20] : memref<4x4xf32, #tpu.memory_space<smem>>
    %47 = vector.extract_strided_slice %1 {offsets = [0, 0], sizes = [1, 256], strides = [1, 1]} : vector<4x256xf32> to vector<1x256xf32>
    %48 = vector.broadcast %46 : f32 to vector<1x256xf32>
    %49 = arith.mulf %48, %47 : vector<1x256xf32>
    %c0_21 = arith.constant 0 : index
    %c2_22 = arith.constant 2 : index
    %50 = memref.load %arg4[%c0_21, %c2_22] : memref<1x4xf32, #tpu.memory_space<smem>>
    %51 = vector.broadcast %50 : f32 to vector<1x256xf32>
    %52 = arith.addf %49, %51 : vector<1x256xf32>
    %c1_23 = arith.constant 1 : index
    %c2_24 = arith.constant 2 : index
    %53 = memref.load %arg3[%c1_23, %c2_24] : memref<4x4xf32, #tpu.memory_space<smem>>
    %54 = vector.extract_strided_slice %1 {offsets = [1, 0], sizes = [1, 256], strides = [1, 1]} : vector<4x256xf32> to vector<1x256xf32>
    %55 = vector.broadcast %53 : f32 to vector<1x256xf32>
    %56 = arith.mulf %55, %54 : vector<1x256xf32>
    %57 = arith.addf %52, %56 : vector<1x256xf32>
    %c2_25 = arith.constant 2 : index
    %c2_26 = arith.constant 2 : index
    %58 = memref.load %arg3[%c2_25, %c2_26] : memref<4x4xf32, #tpu.memory_space<smem>>
    %59 = vector.extract_strided_slice %1 {offsets = [2, 0], sizes = [1, 256], strides = [1, 1]} : vector<4x256xf32> to vector<1x256xf32>
    %60 = vector.broadcast %58 : f32 to vector<1x256xf32>
    %61 = arith.mulf %60, %59 : vector<1x256xf32>
    %62 = arith.addf %57, %61 : vector<1x256xf32>
    %c3_27 = arith.constant 3 : index
    %c2_28 = arith.constant 2 : index
    %63 = memref.load %arg3[%c3_27, %c2_28] : memref<4x4xf32, #tpu.memory_space<smem>>
    %64 = vector.extract_strided_slice %1 {offsets = [3, 0], sizes = [1, 256], strides = [1, 1]} : vector<4x256xf32> to vector<1x256xf32>
    %65 = vector.broadcast %63 : f32 to vector<1x256xf32>
    %66 = arith.mulf %65, %64 : vector<1x256xf32>
    %67 = arith.addf %62, %66 : vector<1x256xf32>
    %c0_29 = arith.constant 0 : index
    %c3_30 = arith.constant 3 : index
    %68 = memref.load %arg3[%c0_29, %c3_30] : memref<4x4xf32, #tpu.memory_space<smem>>
    %69 = vector.extract_strided_slice %1 {offsets = [0, 0], sizes = [1, 256], strides = [1, 1]} : vector<4x256xf32> to vector<1x256xf32>
    %70 = vector.broadcast %68 : f32 to vector<1x256xf32>
    %71 = arith.mulf %70, %69 : vector<1x256xf32>
    %c0_31 = arith.constant 0 : index
    %c3_32 = arith.constant 3 : index
    %72 = memref.load %arg4[%c0_31, %c3_32] : memref<1x4xf32, #tpu.memory_space<smem>>
    %73 = vector.broadcast %72 : f32 to vector<1x256xf32>
    %74 = arith.addf %71, %73 : vector<1x256xf32>
    %c1_33 = arith.constant 1 : index
    %c3_34 = arith.constant 3 : index
    %75 = memref.load %arg3[%c1_33, %c3_34] : memref<4x4xf32, #tpu.memory_space<smem>>
    %76 = vector.extract_strided_slice %1 {offsets = [1, 0], sizes = [1, 256], strides = [1, 1]} : vector<4x256xf32> to vector<1x256xf32>
    %77 = vector.broadcast %75 : f32 to vector<1x256xf32>
    %78 = arith.mulf %77, %76 : vector<1x256xf32>
    %79 = arith.addf %74, %78 : vector<1x256xf32>
    %c2_35 = arith.constant 2 : index
    %c3_36 = arith.constant 3 : index
    %80 = memref.load %arg3[%c2_35, %c3_36] : memref<4x4xf32, #tpu.memory_space<smem>>
    %81 = vector.extract_strided_slice %1 {offsets = [2, 0], sizes = [1, 256], strides = [1, 1]} : vector<4x256xf32> to vector<1x256xf32>
    %82 = vector.broadcast %80 : f32 to vector<1x256xf32>
    %83 = arith.mulf %82, %81 : vector<1x256xf32>
    %84 = arith.addf %79, %83 : vector<1x256xf32>
    %c3_37 = arith.constant 3 : index
    %c3_38 = arith.constant 3 : index
    %85 = memref.load %arg3[%c3_37, %c3_38] : memref<4x4xf32, #tpu.memory_space<smem>>
    %86 = vector.extract_strided_slice %1 {offsets = [3, 0], sizes = [1, 256], strides = [1, 1]} : vector<4x256xf32> to vector<1x256xf32>
    %87 = vector.broadcast %85 : f32 to vector<1x256xf32>
    %88 = arith.mulf %87, %86 : vector<1x256xf32>
    %89 = arith.addf %84, %88 : vector<1x256xf32>
    %90 = tpu.concatenate %23, %45, %67, %89 in 0 : vector<1x256xf32>, vector<1x256xf32>, vector<1x256xf32>, vector<1x256xf32> -> vector<4x256xf32>
    %c0_39 = arith.constant 0 : index
    %c0_40 = arith.constant 0 : index
    %c0_41 = arith.constant 0 : index
    %91 = vector.load %arg5[%c0_39, %c0_40, %c0_41] : memref<1x4x256xf32, #tpu.memory_space<vmem>>, vector<1x4x256xf32>
    %92 = vector.shape_cast %91 : vector<1x4x256xf32> to vector<4x256xf32>
    %93 = vector.shape_cast %90 : vector<4x256xf32> to vector<1x4x256xf32>
    tpu.vector_store %arg5[%c0_39, %c0_40, %c0_41], %93 {strides = array<i32>} : memref<1x4x256xf32, #tpu.memory_space<vmem>>, vector<1x4x256xf32>,
    return
  }
  func.func @transform_0(%arg0: i32, %arg1: i32) -> (i32, i32, i32) {
    %c0_i32 = arith.constant 0 : i32
    %c0_i32_0 = arith.constant 0 : i32
    return %arg0, %c0_i32, %arg1 : i32, i32, i32
  }
  func.func @transform_1(%arg0: i32, %arg1: i32) -> (i32, i32) {
    %c0_i32 = arith.constant 0 : i32
    %c0_i32_0 = arith.constant 0 : i32
    %c0_i32_1 = arith.constant 0 : i32
    return %c0_i32, %c0_i32_0 : i32, i32
  }
  func.func @transform_2(%arg0: i32, %arg1: i32) -> (i32, i32) {
    %c0_i32 = arith.constant 0 : i32
    %c0_i32_0 = arith.constant 0 : i32
    %c0_i32_1 = arith.constant 0 : i32
    return %c0_i32, %c0_i32_0 : i32, i32
  }
  func.func @transform_3(%arg0: i32, %arg1: i32) -> (i32, i32, i32) {
    %c0_i32 = arith.constant 0 : i32
    %c0_i32_0 = arith.constant 0 : i32
    return %arg0, %c0_i32, %arg1 : i32, i32, i32
  }
}

</mosaic_0001>

<llo_original>
// kernel: tpu_custom_call.1
$region0: #{tpu_custom_call.1}
  #allocation0 [shape = 'u32[]', space=smem, size = 0x4, offset = 0x4, fixed_abs, tag = 'smem constant byte address 0x4 - core index']
  #allocation1 [shape = 'u32[144,128]{1,0:T(1,128)}', space=vmem, size = 0x12000, scoped, tag = 'internal scratch']
  %s0 = inlined_call_operand.hbm [shape: f32[2,4,256], index: 0, kind: input, shape index: {}]
  %s1 = inlined_call_operand.hbm [shape: f32[4,4], index: 1, kind: input, shape index: {}]
  %s2 = inlined_call_operand.vmem [shape: f32[1,4], index: 2, kind: input, shape index: {}]
  %s3 = inlined_call_operand.hbm [shape: f32[2,4,256], index: 3, kind: output, shape index: {}]
  %s4 = sld [smem:[#allocation0]]
  $region57: #{tpu_custom_call.1} parent=0
    _
  %s6 = ssub.s32 1, %s4
  %s7 = scalar_select 0, %s6, %s4
  $region1: #{tpu_custom_call.1} parent=0
    #allocation2 [shape = 'u8[8192]{0}', space=vmem, size = 0x2000, scoped, tag = 'input window, operand 0']
    #allocation3 [shape = 's32[2]{0}', space=sflag, size = 0x8, scoped, tag = 'scoped memory for tpu_custom_call.1']
    #allocation4 [shape = 's32[2]{0}', space=sflag, size = 0x8, scoped, tag = 'scoped memory for tpu_custom_call.1']
    #allocation5 [shape = 's32[2]{0}', space=sflag, size = 0x8, scoped, tag = 'scoped memory for tpu_custom_call.1']
    #allocation6 [shape = 's32[2]{0}', space=sflag, size = 0x8, scoped, tag = 'scoped memory for tpu_custom_call.1']
    #allocation7 [shape = 'u8[2048]{0}', space=smem, size = 0x800, scoped, tag = 'input window, operand 1, single buffered']
    #allocation8 [shape = 'u8[512]{0}', space=smem, size = 0x200, scoped, tag = 'input window, operand 2, single buffered']
    #allocation9 [shape = 'u8[8192]{0}', space=vmem, size = 0x2000, scoped, tag = 'output window, operand 0']
    %8 = vsyncpa [#allocation3], 0
    %s9 = scalar_lea.sflag [#allocation3], 1
    %10 = vsyncpa %s9, 0
    %11 = vsyncpa [#allocation5], 0
    %12 = vsyncpa [#allocation6], 0
    %13 = vsyncpa [#allocation4], 0
    %s14 = scalar_lea.sflag [#allocation4], 1
    %15 = vsyncpa %s14, 0
    loop: start=0, step=1, limit=4
    $region2: #{tpu_custom_call.1} parent=1 // loop_pre_header
      _
    $region3: #{tpu_custom_call.1} parent=1 // loop_header
      %s17 = sphi 0, %s21
      %p18 = scmp.ge.s32.totalorder %s17, 4
      %s24 = sphi 0, %s36
      %s25 = sphi 0, %s32
      %s26 = sphi 0, %s24
      %s27 = sphi 0, %s25
      %s28 = sphi 0, %s26
      %s29 = sphi 0, %s27
      %s41 = sphi 0, %s43
      %s44 = sphi 0, %s41
      %s45 = sphi 0, %s44
      %s61 = sphi 0, %s45
      %s65 = sphi 0, %s65
      %s67 = sphi 0, %s65
      %s68 = sphi 0, %s67
      %s82 = sphi 0, %s68
      %s86 = sphi 0, %s86
      %s88 = sphi 0, %s86
      %s89 = sphi 0, %s88
      %s103 = sphi 0, %s89
      %s111 = sphi 0, %s113
      %s114 = sphi 0, %s111
      %s115 = sphi 0, %s114
      %s131 = sphi 0, %s115
    $region4: #{tpu_custom_call.1} parent=1 // loop_header_branch
      %20 = sbr.rel (%p18) target = $region8
    $region5: #{tpu_custom_call.1} parent=1 // loop_body
      %s22 = ssub.s32 %s17, 1
      %s23 = ssub.s32 %s17, 2
      %s30 = sadd.s32 1, %s25
      %p31 = scmp.ge.s32.totalorder %s30, 1
      %s32 = scalar_select %p31, 0, %s30
      %s33 = sadd.s32 1, %s24
      %s34 = scalar_select %p31, %s33, %s24
      %p35 = scmp.ge.s32.totalorder %s34, 2
      %s36 = scalar_select %p35, 0, %s34
      %s37 = ssub.s32 %s24, %s36
      %s38 = ssub.s32 %s25, %s32
      %s39 = sor.u32 %s37, %s38
      %p40 = scmp.eq.s32.totalorder %s39, 0
      %s42 = sadd.s32 %s41, 1
      %s43 = scalar_select %p40, %s41, %s42
      %p46 = pneg %p40
      %p47 = scmp.eq.s32.totalorder %s17, 1
      %p48 = por %p46, %p47
      %p49 = scmp.ne.s32.totalorder %s41, %s44
      %p50 = scmp.eq.s32.totalorder %s17, 0
      %p51 = por %p49, %p50
      %p52 = scmp.ne.s32.totalorder %s41, %s44
      %p53 = scmp.eq.s32.totalorder %s22, 1
      %p54 = por %p52, %p53
      %p55 = scmp.ne.s32.totalorder %s44, %s45
      %p56 = scmp.eq.s32.totalorder %s22, 0
      %p57 = por %p55, %p56
      %p58 = scmp.ne.s32.totalorder %s44, %s45
      %p59 = scmp.eq.s32.totalorder %s23, 1
      %p60 = por %p58, %p59
      %p62 = scmp.ne.s32.totalorder %s45, %s61
      %p63 = scmp.eq.s32.totalorder %s23, 0
      %p64 = por %p62, %p63
      %s66 = sadd.s32 %s65, 1
      %p69 = scmp.eq.s32.totalorder %s17, 1
      %p70 = scmp.ne.s32.totalorder %s65, %s67
      %p71 = scmp.eq.s32.totalorder %s17, 0
      %p72 = por %p70, %p71
      %p73 = scmp.ne.s32.totalorder %s65, %s67
      %p74 = scmp.eq.s32.totalorder %s22, 1
      %p75 = por %p73, %p74
      %p76 = scmp.ne.s32.totalorder %s67, %s68
      %p77 = scmp.eq.s32.totalorder %s22, 0
      %p78 = por %p76, %p77
      %p79 = scmp.ne.s32.totalorder %s67, %s68
      %p80 = scmp.eq.s32.totalorder %s23, 1
      %p81 = por %p79, %p80
      %p83 = scmp.ne.s32.totalorder %s68, %s82
      %p84 = scmp.eq.s32.totalorder %s23, 0
      %p85 = por %p83, %p84
      %s87 = sadd.s32 %s86, 1
      %p90 = scmp.eq.s32.totalorder %s17, 1
      %p91 = scmp.ne.s32.totalorder %s86, %s88
      %p92 = scmp.eq.s32.totalorder %s17, 0
      %p93 = por %p91, %p92
      %p94 = scmp.ne.s32.totalorder %s86, %s88
      %p95 = scmp.eq.s32.totalorder %s22, 1
      %p96 = por %p94, %p95
      %p97 = scmp.ne.s32.totalorder %s88, %s89
      %p98 = scmp.eq.s32.totalorder %s22, 0
      %p99 = por %p97, %p98
      %p100 = scmp.ne.s32.totalorder %s88, %s89
      %p101 = scmp.eq.s32.totalorder %s23, 1
      %p102 = por %p100, %p101
      %p104 = scmp.ne.s32.totalorder %s89, %s103
      %p105 = scmp.eq.s32.totalorder %s23, 0
      %p106 = por %p104, %p105
      %s107 = ssub.s32 %s24, %s36
      %s108 = ssub.s32 %s25, %s32
      %s109 = sor.u32 %s107, %s108
      %p110 = scmp.eq.s32.totalorder %s109, 0
      %s112 = sadd.s32 %s111, 1
      %s113 = scalar_select %p110, %s111, %s112
      %p116 = pneg %p110
      %p117 = scmp.eq.s32.totalorder %s17, 1
      %p118 = por %p116, %p117
      %p119 = scmp.ne.s32.totalorder %s111, %s114
      %p120 = scmp.eq.s32.totalorder %s17, 0
      %p121 = por %p119, %p120
      %p122 = scmp.ne.s32.totalorder %s111, %s114
      %p123 = scmp.eq.s32.totalorder %s22, 1
      %p124 = por %p122, %p123
      %p125 = scmp.ne.s32.totalorder %s114, %s115
      %p126 = scmp.eq.s32.totalorder %s22, 0
      %p127 = por %p125, %p126
      %p128 = scmp.ne.s32.totalorder %s114, %s115
      %p129 = scmp.eq.s32.totalorder %s23, 1
      %p130 = por %p128, %p129
      %p132 = scmp.ne.s32.totalorder %s115, %s131
      %p133 = scmp.eq.s32.totalorder %s23, 0
      %p134 = por %p132, %p133
      %p135 = scmp.le.s32.totalorder 1, %s17
      %p136 = scmp.lt.s32.totalorder %s17, 3
      %p137 = pnand %p135, %p136
      %p138 = pneg %p137
      // Predicated region
      $region9: #{tpu_custom_call.1} parent=5 // pred_check
        _
      $region10: #{tpu_custom_call.1} parent=5 // pred_check_branch
        %140 = sbr.rel (%p137) target = $region12
      $region11: #{tpu_custom_call.1} parent=5 // pred_region
        %s141 = ssub.s32 %s17, 1
        // Predicated region
        $region13: #{tpu_custom_call.1} parent=11 // pred_check
          %p142 = pneg %p78
        $region14: #{tpu_custom_call.1} parent=11 // pred_check_branch
          %144 = sbr.rel (%p142) target = $region16
        $region15: #{tpu_custom_call.1} parent=11 // pred_region
          %s146 = ssub.s32 64, 64
          %147 = vsyncadd [#allocation5], %s146
          %150 = dma.hbm_to_smem %s1, 64, [#allocation7], [#allocation5]
        $region16: #{tpu_custom_call.1} parent=11 // pred_fallthru
          _
        // Predicated region
        $region17: #{tpu_custom_call.1} parent=11 // pred_check
          %p151 = pneg %p99
        $region18: #{tpu_custom_call.1} parent=11 // pred_check_branch
          %153 = sbr.rel (%p151) target = $region20
        $region19: #{tpu_custom_call.1} parent=11 // pred_region
          %s155 = ssub.s32 16, 16
          %156 = vsyncadd [#allocation6], %s155
          %s158 = sshll.u32 %s2, 4
          %s159 = int_to_ptr.vmem [resolvable:$true] %s158
          %161 = dma.vmem_to_smem %s159, 16, [#allocation8], [#allocation6]
        $region20: #{tpu_custom_call.1} parent=11 // pred_fallthru
          _
      $region12: #{tpu_custom_call.1} parent=5 // pred_fallthru
        _
      %p162 = scmp.lt.s32.totalorder %s17, 2
      // Predicated region
      $region21: #{tpu_custom_call.1} parent=5 // pred_check
        %p163 = pneg %p162
      $region22: #{tpu_custom_call.1} parent=5 // pred_check_branch
        %165 = sbr.rel (%p163) target = $region24
      $region23: #{tpu_custom_call.1} parent=5 // pred_region
        // Predicated region
        $region25: #{tpu_custom_call.1} parent=23 // pred_check
          %p166 = pneg %p51
        $region26: #{tpu_custom_call.1} parent=23 // pred_check_branch
          %168 = sbr.rel (%p166) target = $region28
        $region27: #{tpu_custom_call.1} parent=23 // pred_region
          %s169 = sand.u32 %s41, 1
          %s170 = scalar_lea.sflag [#allocation3], %s169
          %s171 = sand.u32 %s41, 1
          %s172 = smul.addr %s171, 8
          %s173 = scalar_lea.vmem [#allocation2], %s172
          %s174 = smul.u32 2, %s25
          %s176 = ssub.s32 128, 128
          %177 = vsyncadd %s170, %s176
          %s178 = smul.addr %s24, 2
          %s179 = sadd.s32 %s174, %s178
          %s180 = smul.addr %s179, 64
          %s181 = scalar_lea.hbm %s0, %s180
          %s183 = sshll.u32 %s173, 4
          %s184 = int_to_ptr.vmem [resolvable:$true] %s183
          %186 = dma.hbm_to_vmem [thread:$0]  %s181, 128, %s184, %s170
        $region28: #{tpu_custom_call.1} parent=23 // pred_fallthru
          _
      $region24: #{tpu_custom_call.1} parent=5 // pred_fallthru
        _
      %p187 = scmp.le.s32.totalorder 1, %s17
      %p188 = scmp.lt.s32.totalorder %s17, 3
      %p189 = pnand %p187, %p188
      %p190 = pneg %p189
      // Predicated region
      $region29: #{tpu_custom_call.1} parent=5 // pred_check
        _
      $region30: #{tpu_custom_call.1} parent=5 // pred_check_branch
        %192 = sbr.rel (%p189) target = $region32
      $region31: #{tpu_custom_call.1} parent=5 // pred_region
        %s193 = ssub.s32 %s17, 1
        %s194 = sand.u32 %s44, 1
        %s195 = scalar_lea.sflag [#allocation3], %s194
        %s196 = sand.u32 %s44, 1
        %s197 = smul.addr %s196, 8
        %s198 = scalar_lea.vmem [#allocation2], %s197
        // Predicated region
        $region33: #{tpu_custom_call.1} parent=31 // pred_check
          %p199 = pneg %p57
        $region34: #{tpu_custom_call.1} parent=31 // pred_check_branch
          %201 = sbr.rel (%p199) target = $region36
        $region35: #{tpu_custom_call.1} parent=31 // pred_region
          %202 = dma.done %s195, 128
        $region36: #{tpu_custom_call.1} parent=31 // pred_fallthru
          _
        // Predicated region
        $region37: #{tpu_custom_call.1} parent=31 // pred_check
          %p203 = pneg %p78
        $region38: #{tpu_custom_call.1} parent=31 // pred_check_branch
          %205 = sbr.rel (%p203) target = $region40
        $region39: #{tpu_custom_call.1} parent=31 // pred_region
          %206 = dma.done [#allocation5], 64
        $region40: #{tpu_custom_call.1} parent=31 // pred_fallthru
          _
        // Predicated region
        $region41: #{tpu_custom_call.1} parent=31 // pred_check
          %p207 = pneg %p99
        $region42: #{tpu_custom_call.1} parent=31 // pred_check_branch
          %209 = sbr.rel (%p207) target = $region44
        $region43: #{tpu_custom_call.1} parent=31 // pred_region
          %210 = dma.done [#allocation6], 16
        $region44: #{tpu_custom_call.1} parent=31 // pred_fallthru
          _
        %211 = sfence
        %s212 = sand.u32 %s44, 1
        %s213 = scalar_lea.sflag [#allocation3], %s212
        %s214 = sand.u32 %s44, 1
        %s215 = smul.addr %s214, 8
        %s216 = scalar_lea.vmem [#allocation2], %s215
        %p217 = pneg %p57
        %p218 = pneg %p54
        %p219 = pneg %p78
        %p220 = pneg %p75
        %p221 = pneg %p99
        %p222 = pneg %p96
        %p223 = pneg %p127
        %p224 = pneg %p124
        %s225 = sand.u32 %s114, 1
        %s226 = scalar_lea.sflag [#allocation4], %s225
        %s227 = sand.u32 %s114, 1
        %s228 = smul.addr %s227, 8
        %s229 = scalar_lea.vmem [#allocation9], %s228
        %s230 = smul.u32 2, %s27
        %s231 = smul.u32 2, %s27
        %v232 = vld [vmem:[%s198] sm:$0xff]
        %s233 = sld [smem:[#allocation7]]
        %v234 = vstv %s233
        %v235 = vmul.f32 %v234, %v232
        %s236 = sld [smem:[#allocation8]]
        %v237 = vstv %s236
        %v238 = vadd.f32 %v235, %v237
        %s239 = sld [smem:[#allocation7 + $0x80]]
        %v240 = vstv %s239
        %v241 = vmul.f32 %v240, %v232
        %v243 = vrot.slane %v241, 5
        %v244 = vrot.slane %v243, 4
        %v246 = vadd.f32 %v238, %v244
        %s247 = sld [smem:[#allocation7 + $0x100]]
        %v248 = vstv %s247
        %v249 = vmul.f32 %v248, %v232
        %v251 = vrot.slane %v249, 6
        %v252 = vrot.slane %v251, 4
        %v254 = vadd.f32 %v246, %v252
        %s255 = sld [smem:[#allocation7 + $0x180]]
        %v256 = vstv %s255
        %v257 = vmul.f32 %v256, %v232
        %v259 = vrot.slane %v257, 7
        %v260 = vrot.slane %v259, 4
        %v262 = vadd.f32 %v254, %v260
        %s263 = sld [smem:[#allocation7 + $0x1]]
        %v264 = vstv %s263
        %v265 = vmul.f32 %v264, %v232
        %s266 = sld [smem:[#allocation8 + $0x1]]
        %v267 = vstv %s266
        %v268 = vadd.f32 %v265, %v267
        %s269 = sld [smem:[#allocation7 + $0x81]]
        %v270 = vstv %s269
        %v271 = vmul.f32 %v270, %v232
        %v273 = vrot.slane %v271, 5
        %v274 = vrot.slane %v273, 4
        %v276 = vadd.f32 %v268, %v274
        %s277 = sld [smem:[#allocation7 + $0x101]]
        %v278 = vstv %s277
        %v279 = vmul.f32 %v278, %v232
        %v281 = vrot.slane %v279, 6
        %v282 = vrot.slane %v281, 4
        %v284 = vadd.f32 %v276, %v282
        %s285 = sld [smem:[#allocation7 + $0x181]]
        %v286 = vstv %s285
        %v287 = vmul.f32 %v286, %v232
        %v289 = vrot.slane %v287, 7
        %v290 = vrot.slane %v289, 4
        %v292 = vadd.f32 %v284, %v290
        %s293 = sld [smem:[#allocation7 + $0x2]]
        %v294 = vstv %s293
        %v295 = vmul.f32 %v294, %v232
        %s296 = sld [smem:[#allocation8 + $0x2]]
        %v297 = vstv %s296
        %v298 = vadd.f32 %v295, %v297
        %s299 = sld [smem:[#allocation7 + $0x82]]
        %v300 = vstv %s299
        %v301 = vmul.f32 %v300, %v232
        %v303 = vrot.slane %v301, 5
        %v304 = vrot.slane %v303, 4
        %v306 = vadd.f32 %v298, %v304
        %s307 = sld [smem:[#allocation7 + $0x102]]
        %v308 = vstv %s307
        %v309 = vmul.f32 %v308, %v232
        %v311 = vrot.slane %v309, 6
        %v312 = vrot.slane %v311, 4
        %v314 = vadd.f32 %v306, %v312
        %s315 = sld [smem:[#allocation7 + $0x182]]
        %v316 = vstv %s315
        %v317 = vmul.f32 %v316, %v232
        %v319 = vrot.slane %v317, 7
        %v320 = vrot.slane %v319, 4
        %v322 = vadd.f32 %v314, %v320
        %s323 = sld [smem:[#allocation7 + $0x3]]
        %v324 = vstv %s323
        %v325 = vmul.f32 %v324, %v232
        %s326 = sld [smem:[#allocation8 + $0x3]]
        %v327 = vstv %s326
        %v328 = vadd.f32 %v325, %v327
        %s329 = sld [smem:[#allocation7 + $0x83]]
        %v330 = vstv %s329
        %v331 = vmul.f32 %v330, %v232
        %v333 = vrot.slane %v331, 5
        %v334 = vrot.slane %v333, 4
        %v336 = vadd.f32 %v328, %v334
        %s337 = sld [smem:[#allocation7 + $0x103]]
        %v338 = vstv %s337
        %v339 = vmul.f32 %v338, %v232
        %v341 = vrot.slane %v339, 6
        %v342 = vrot.slane %v341, 4
        %v344 = vadd.f32 %v336, %v342
        %s345 = sld [smem:[#allocation7 + $0x183]]
        %v346 = vstv %s345
        %v347 = vmul.f32 %v346, %v232
        %v349 = vrot.slane %v347, 7
        %v350 = vrot.slane %v349, 4
        %v352 = vadd.f32 %v344, %v350
        %v354 = vlaneseq
        %v355 = vshrl.u32 %v354, 7
        %v356 = vsub.s32 0, %v355
        %v357 = vrot.slane %v262, %v356
        %v358 = vlaneseq
        %v359 = vshrl.u32 %v358, 7
        %v360 = vsub.s32 4, %v359
        %v361 = vrot.slane %v262, %v360
        %v365 = vlaneseq
        %v366 = vshrl.u32 %v365, 7
        %v367 = vsub.s32 0, %v366
        %v368 = vrot.slane %v292, %v367
        %v369 = vlaneseq
        %v370 = vshrl.u32 %v369, 7
        %v371 = vsub.s32 4, %v370
        %v372 = vrot.slane %v292, %v371
        %v376 = vlaneseq
        %v377 = vshrl.u32 %v376, 7
        %v378 = vsub.s32 0, %v377
        %v379 = vrot.slane %v322, %v378
        %v380 = vlaneseq
        %v381 = vshrl.u32 %v380, 7
        %v382 = vsub.s32 4, %v381
        %v383 = vrot.slane %v322, %v382
        %v387 = vlaneseq
        %v388 = vshrl.u32 %v387, 7
        %v389 = vsub.s32 0, %v388
        %v390 = vrot.slane %v352, %v389
        %v391 = vlaneseq
        %v392 = vshrl.u32 %v391, 7
        %v393 = vsub.s32 4, %v392
        %v394 = vrot.slane %v352, %v393
        %vm397 = vcmask 1040384
        %v398 = vsel %vm397, %v357, %v368
        %v399 = vsel %vm397, %v361, %v372
        %vm400 = vcmask 1041408
        %v401 = vsel %vm400, %v398, %v379
        %v402 = vsel %vm400, %v399, %v383
        %vm403 = vcmask 1042432
        %v404 = vsel %vm403, %v401, %v390
        %v405 = vsel %vm403, %v402, %v394
        %v408 = vcombine.low %v404, %v405
        %410 = vst [vmem:[%s229] sm:$0xff] %v408
        %s411 = sand.u32 %s114, 1
        %s412 = scalar_lea.sflag [#allocation4], %s411
        %s413 = sand.u32 %s114, 1
        %s414 = smul.addr %s413, 8
        %s415 = scalar_lea.vmem [#allocation9], %s414
        // Predicated region
        $region45: #{tpu_custom_call.1} parent=31 // pred_check
          %p416 = pneg %p124
        $region46: #{tpu_custom_call.1} parent=31 // pred_check_branch
          %418 = sbr.rel (%p416) target = $region48
        $region47: #{tpu_custom_call.1} parent=31 // pred_region
          %s419 = smul.u32 2, %s27
          %s421 = ssub.s32 128, 128
          %422 = vsyncadd %s412, %s421
          %s423 = smul.addr %s26, 2
          %s424 = sadd.s32 %s419, %s423
          %s425 = smul.addr %s424, 64
          %s426 = scalar_lea.hbm %s3, %s425
          %s428 = sshll.u32 %s415, 4
          %s429 = int_to_ptr.vmem [resolvable:$true] %s428
          %431 = dma.vmem_to_hbm [thread:$0]  %s429, 128, %s426, %s412
        $region48: #{tpu_custom_call.1} parent=31 // pred_fallthru
          _
      $region32: #{tpu_custom_call.1} parent=5 // pred_fallthru
        _
      %p432 = scmp.le.s32.totalorder 2, %s17
      // Predicated region
      $region49: #{tpu_custom_call.1} parent=5 // pred_check
        %p433 = pneg %p432
      $region50: #{tpu_custom_call.1} parent=5 // pred_check_branch
        %435 = sbr.rel (%p433) target = $region52
      $region51: #{tpu_custom_call.1} parent=5 // pred_region
        %s436 = ssub.s32 %s17, 2
        // Predicated region
        $region53: #{tpu_custom_call.1} parent=51 // pred_check
          %p437 = pneg %p130
        $region54: #{tpu_custom_call.1} parent=51 // pred_check_branch
          %439 = sbr.rel (%p437) target = $region56
        $region55: #{tpu_custom_call.1} parent=51 // pred_region
          %s440 = sand.u32 %s115, 1
          %s441 = scalar_lea.sflag [#allocation4], %s440
          %s442 = sand.u32 %s115, 1
          %s443 = smul.addr %s442, 8
          %s444 = scalar_lea.vmem [#allocation9], %s443
          %445 = dma.done %s441, 128
        $region56: #{tpu_custom_call.1} parent=51 // pred_fallthru
          _
      $region52: #{tpu_custom_call.1} parent=5 // pred_fallthru
        _
    $region6: #{tpu_custom_call.1} parent=1 // loop_footer
      %s21 = sadd.s32 1, %s17
    $region7: #{tpu_custom_call.1} parent=1 // loop_footer_branch
      %16 = sbr.rel target = $region3
    $region8: #{tpu_custom_call.1} parent=1 // loop_exit
      _
    %446 = vsyncpa [#allocation3], 1
    %s447 = scalar_lea.sflag [#allocation3], 1
    %448 = vsyncpa %s447, 1
    %449 = vsyncpa [#allocation4], 1
    %s450 = scalar_lea.sflag [#allocation4], 1
    %451 = vsyncpa %s450, 1
    %452 = vsyncpa [#allocation5], 1
    %s453 = scalar_lea.sflag [#allocation5], 1
    %454 = vsyncpa %s453, 1
    %455 = vsyncpa [#allocation6], 1
    %s456 = scalar_lea.sflag [#allocation6], 1
    %457 = vsyncpa %s456, 1

</llo_original>
